<compile_context>
chip_gen: v7x
topology: tpu7x:2x2x1
jax: 0.10.0
libtpu: 0.0.40
codegen_flags: <defaults>
</compile_context>

<pallas_src>
import math
import functools

import jax
import jax.numpy as jnp
from jax.experimental import pallas as pl
from jax.experimental.pallas import tpu as pltpu


def _self_attention_kernel(q_ref, k_ref, v_ref,
                           wq_ref, bq_ref, wk_ref, bk_ref, wv_ref, bv_ref,
                           y_ref, w_ref,
                           k_proj, v_proj, *, scale):
    """One (batch-block, query-tile) grid step.

    q_ref:        (BT, TQ,  dim_in)  bf16
    k_ref, v_ref: (BT, SEQ, dim_in)  bf16
    w*_ref:       (dim_in, dim_*)    bf16 (pre-cast in wrapper)
    b*_ref:       (1, dim_*)         f32
    y_ref:        (BT, TQ,  dim_v)   f32
    w_ref:        (BT, TQ,  SEQ)     f32
    k_proj/v_proj: bf16 VMEM scratch holding projected K/V for this batch block.
    """
    cdt = jnp.bfloat16
    bt, tq, dim_in = q_ref.shape
    _, seq, _ = k_ref.shape
    dim_q = wq_ref.shape[1]
    dim_v = wv_ref.shape[1]

    # ---- K/V projections: once per batch block, cached in VMEM scratch.
    # (qt axis is "arbitrary" => sequential per batch block, so scratch persists.)
    @pl.when(pl.program_id(1) == 0)
    def _():
        k2 = k_ref[...].reshape(bt * seq, dim_in)
        v2 = v_ref[...].reshape(bt * seq, dim_in)
        k = jnp.dot(k2, wk_ref[...], preferred_element_type=jnp.float32) + bk_ref[...]
        v = jnp.dot(v2, wv_ref[...], preferred_element_type=jnp.float32) + bv_ref[...]
        k_proj[...] = k.reshape(bt, seq, dim_q).astype(cdt)
        v_proj[...] = v.reshape(bt, seq, dim_v).astype(cdt)

    # ---- Q projection for this query tile (batch folded into the MXU M dim).
    q2 = q_ref[...].reshape(bt * tq, dim_in)
    q = jnp.dot(q2, wq_ref[...], preferred_element_type=jnp.float32) + bq_ref[...]
    # 1/sqrt(dim_q) applied to q (tq x dim_q) rather than the (tq x seq) scores.
    q = (q * scale).reshape(bt, tq, dim_q).astype(cdt)

    k = k_proj[...]
    v = v_proj[...]

    # ---- Scores: batched transposed contraction (no explicit k.T / XLU work).
    scores = jnp.einsum('bqd,bkd->bqk', q, k, preferred_element_type=jnp.float32)
    # TODO(synk): optional boolean mask (masked_fill with -1e9) is not wired in;
    # the reference forward is exercised with its default mask=None.

    # ---- Numerically-stable softmax; normalization is deferred so the PV
    # matmul does not depend on the EUP reciprocal / big VPU multiply.
    m = jnp.max(scores, axis=-1, keepdims=True)
    p = jnp.exp(scores - m)
    denom = jnp.sum(p, axis=-1, keepdims=True)
    recip = pl.reciprocal(denom, approx=True)

    y = jnp.einsum('bqk,bkd->bqd', p.astype(cdt), v,
                   preferred_element_type=jnp.float32)
    y_ref[...] = (y * recip).astype(y_ref.dtype)
    w_ref[...] = (p * recip).astype(w_ref.dtype)


def _batch_tile_candidates(n, cap):
    return [d for d in range(max(1, min(n, cap)), 0, -1) if n % d == 0] or [1]


def _q_tile_candidates(seq, cap):
    # Sublane-friendly query tiles: multiples of 8 dividing seq, or full seq.
    cands = [t for t in range(max(1, min(seq, cap)), 0, -1)
             if seq % t == 0 and (t % 8 == 0 or t == seq)]
    return cands or [seq]


def _vmem_estimate_bytes(bt, qt, seq, dim_in, dim_q, dim_v):
    b2, b4 = 2, 4
    est = 0
    est += 2 * bt * qt * dim_in * b2                 # q block (double-buffered)
    est += 2 * 2 * bt * seq * dim_in * b2            # k, v blocks (double-buffered)
    est += 2 * dim_in * (2 * dim_q + dim_v) * b2     # weights (double-buffered)
    est += bt * seq * (dim_q + dim_v) * b2           # projected K/V scratch
    est += 2 * bt * qt * dim_v * b4                  # y block (double-buffered)
    est += 2 * bt * qt * seq * b4                    # softmax-weights block
    est += 4 * bt * qt * seq * b4                    # live f32 scores/p intermediates
    est += 2 * bt * seq * max(dim_q, dim_v) * b4     # projection temps at qt == 0
    return est


def _vmem_limit_bytes():
    try:
        cap = int(pltpu.get_tpu_info().vmem_capacity_bytes)
    except Exception:
        cap = 64 * 1024 * 1024   # conservative fallback (v7x per-core VMEM)
    # ~75% of physical: ~96 MiB on 128 MiB parts (v5e/v6e), ~48 MiB on v7x.
    return int(cap) * 3 // 4


def self_attention_pallas(query, key, value, wq, bq, wk, bk, wv, bv,
                          *, batch_tile=None, q_tile=None):
    N, seq, dim_in = query.shape
    dim_q = wq.shape[1]
    dim_v = wv.shape[1]
    scale = 1.0 / math.sqrt(dim_q)

    # ---- VMEM-budgeted, sublane/lane-friendly tile selection.
    vmem_limit = _vmem_limit_bytes()
    budget = int(vmem_limit * 0.9)
    bt_cands = _batch_tile_candidates(N, batch_tile if batch_tile else 8)
    qt_cands = _q_tile_candidates(seq, q_tile if q_tile else 256)
    bi = qi = 0
    while _vmem_estimate_bytes(bt_cands[bi], qt_cands[qi],
                               seq, dim_in, dim_q, dim_v) > budget:
        if bi + 1 < len(bt_cands):
            bi += 1          # shrink batch tile first
        elif qi + 1 < len(qt_cands):
            qi += 1          # then shrink query tile
        else:
            break
    batch_tile, q_tile = bt_cands[bi], qt_cands[qi]

    # ---- Pre-cast MXU operands to bf16 once in the wrapper (no per-step casts,
    # half the input/weight DMA bytes).  Biases stay f32 (tiny, added post-acc).
    cdt = jnp.bfloat16
    query_c = query.astype(cdt)
    key_c = key.astype(cdt)
    value_c = value.astype(cdt)
    wq_c, wk_c, wv_c = wq.astype(cdt), wk.astype(cdt), wv.astype(cdt)
    bq2 = bq.reshape(1, dim_q).astype(jnp.float32)
    bk2 = bk.reshape(1, dim_q).astype(jnp.float32)
    bv2 = bv.reshape(1, dim_v).astype(jnp.float32)

    kernel = functools.partial(_self_attention_kernel, scale=scale)
    grid = (N // batch_tile, seq // q_tile)

    q_spec = pl.BlockSpec((batch_tile, q_tile, dim_in), lambda b, qt: (b, qt, 0))
    kv_spec = pl.BlockSpec((batch_tile, seq, dim_in), lambda b, qt: (b, 0, 0))
    full2d = lambda shape: pl.BlockSpec(shape, lambda b, qt: (0, 0))

    # Cost hint for XLA scheduling (K/V projections counted once per batch).
    flops = (2 * N * seq * dim_in * (2 * dim_q + dim_v)
             + 2 * N * seq * seq * (dim_q + dim_v))
    transcendentals = N * seq * seq + N * seq
    bytes_accessed = (3 * N * seq * dim_in * 2
                      + dim_in * (2 * dim_q + dim_v) * 2
                      + N * seq * dim_v * 4
                      + N * seq * seq * 4)

    y, weights = pl.pallas_call(
        kernel,
        out_shape=(
            jax.ShapeDtypeStruct((N, seq, dim_v), jnp.float32),
            jax.ShapeDtypeStruct((N, seq, seq), jnp.float32),
        ),
        grid_spec=pltpu.PrefetchScalarGridSpec(
            num_scalar_prefetch=0,
            grid=grid,
            in_specs=[
                q_spec,                       # query
                kv_spec,                      # key
                kv_spec,                      # value
                full2d((dim_in, dim_q)),      # Wq
                full2d((1, dim_q)),           # bq
                full2d((dim_in, dim_q)),      # Wk
                full2d((1, dim_q)),           # bk
                full2d((dim_in, dim_v)),      # Wv
                full2d((1, dim_v)),           # bv
            ],
            out_specs=(
                pl.BlockSpec((batch_tile, q_tile, dim_v),
                             lambda b, qt: (b, qt, 0)),   # y
                pl.BlockSpec((batch_tile, q_tile, seq),
                             lambda b, qt: (b, qt, 0)),   # softmax weights
            ),
            scratch_shapes=[
                pltpu.VMEM((batch_tile, seq, dim_q), cdt),   # projected K cache
                pltpu.VMEM((batch_tile, seq, dim_v), cdt),   # projected V cache
            ],
        ),
        compiler_params=pltpu.CompilerParams(
            # Batch stays "parallel" (v7x megacore sharding); the query-tile axis
            # is "arbitrary" so each batch block's qt steps run sequentially and
            # reuse the K/V projection scratch.
            dimension_semantics=("parallel", "arbitrary"),
            vmem_limit_bytes=vmem_limit,
        ),
        cost_estimate=pl.CostEstimate(
            flops=int(flops),
            transcendentals=int(transcendentals),
            bytes_accessed=int(bytes_accessed)),
    )(query_c, key_c, value_c, wq_c, bq2, wk_c, bk2, wv_c, bv2)
    return y, weights


def _xavier_uniform(key, fan_in, fan_out):
    # Matches torch.nn.init.xavier_uniform_ (gain=1).
    limit = math.sqrt(6.0 / (fan_in + fan_out))
    return jax.random.uniform(key, (fan_in, fan_out), jnp.float32, -limit, limit)


def _linear_bias(key, fan_in, fan_out):
    # Matches torch.nn.Linear default bias init: U(-1/sqrt(fan_in), 1/sqrt(fan_in)).
    bound = 1.0 / math.sqrt(fan_in)
    return jax.random.uniform(key, (fan_out,), jnp.float32, -bound, bound)


def _reference(query, key, value, wq, bq, wk, bk, wv, bv):
    q = query @ wq + bq
    k = key @ wk + bk
    v = value @ wv + bv
    dim_q = wq.shape[1]
    scores = jnp.einsum("nkd,njd->nkj", q, k) / math.sqrt(dim_q)
    w = jax.nn.softmax(scores, axis=-1)
    return jnp.einsum("nkj,njd->nkd", w, v), w


if __name__ == "__main__":
    N, SEQ, DIM_IN, DIM_Q, DIM_V = 2, 8, 32, 32, 32

    root = jax.random.PRNGKey(0)
    k_q, k_k, k_v, k_wq, k_wk, k_wv, k_bq, k_bk, k_bv = jax.random.split(root, 9)

    query = jax.random.normal(k_q, (N, SEQ, DIM_IN), jnp.float32)
    key = jax.random.normal(k_k, (N, SEQ, DIM_IN), jnp.float32)
    value = jax.random.normal(k_v, (N, SEQ, DIM_IN), jnp.float32)

    wq = _xavier_uniform(k_wq, DIM_IN, DIM_Q)
    wk = _xavier_uniform(k_wk, DIM_IN, DIM_Q)
    wv = _xavier_uniform(k_wv, DIM_IN, DIM_V)
    bq = _linear_bias(k_bq, DIM_IN, DIM_Q)
    bk = _linear_bias(k_bk, DIM_IN, DIM_Q)
    bv = _linear_bias(k_bv, DIM_IN, DIM_V)

    y, w = self_attention_pallas(query, key, value, wq, bq, wk, bk, wv, bv)
    jax.block_until_ready((y, w))

    y_ref, w_ref = _reference(query, key, value, wq, bq, wk, bk, wv, bv)
    # bf16 MXU operands + approx reciprocal vs. the pure-f32 reference.
    assert jnp.allclose(y, y_ref, atol=1e-1, rtol=1e-1), float(jnp.max(jnp.abs(y - y_ref)))
    assert jnp.allclose(w, w_ref, atol=3e-2, rtol=3e-2), float(jnp.max(jnp.abs(w - w_ref)))

    print("KERNEL_OK")
</pallas_src>

<mosaic_0001>
module attributes {stable_mosaic.version = 11 : i64} {
  func.func @_self_attention_kernel(%arg0: i32, %arg1: i32, %arg2: memref<2x8x32xbf16, #tpu.memory_space<vmem>>, %arg3: memref<2x8x32xbf16, #tpu.memory_space<vmem>>, %arg4: memref<2x8x32xbf16, #tpu.memory_space<vmem>>, %arg5: memref<32x32xbf16, #tpu.memory_space<vmem>>, %arg6: memref<1x32xf32, #tpu.memory_space<vmem>>, %arg7: memref<32x32xbf16, #tpu.memory_space<vmem>>, %arg8: memref<1x32xf32, #tpu.memory_space<vmem>>, %arg9: memref<32x32xbf16, #tpu.memory_space<vmem>>, %arg10: memref<1x32xf32, #tpu.memory_space<vmem>>, %arg11: memref<2x8x32xf32, #tpu.memory_space<vmem>>, %arg12: memref<2x8x8xf32, #tpu.memory_space<vmem>>, %arg13: memref<2x8x32xbf16, #tpu.memory_space<vmem>>, %arg14: memref<2x8x32xbf16, #tpu.memory_space<vmem>>) attributes {dimension_semantics = [#tpu.dimension_semantics<parallel>, #tpu.dimension_semantics<arbitrary>], iteration_bounds = array<i64: 1, 1>, scalar_prefetch = 0 : i64, scratch_operands = 2 : i64, tpu.core_type = #tpu.core_type<tc>, window_params = [{transform_indices = @transform_0, window_bounds = array<i64: 2, 8, 32>}, {transform_indices = @transform_1, window_bounds = array<i64: 2, 8, 32>}, {transform_indices = @transform_2, window_bounds = array<i64: 2, 8, 32>}, {pipeline_mode = #tpu.pipeline_mode<synchronous>, transform_indices = @transform_3, window_bounds = array<i64: 32, 32>}, {pipeline_mode = #tpu.pipeline_mode<synchronous>, transform_indices = @transform_4, window_bounds = array<i64: 1, 32>}, {pipeline_mode = #tpu.pipeline_mode<synchronous>, transform_indices = @transform_5, window_bounds = array<i64: 32, 32>}, {pipeline_mode = #tpu.pipeline_mode<synchronous>, transform_indices = @transform_6, window_bounds = array<i64: 1, 32>}, {pipeline_mode = #tpu.pipeline_mode<synchronous>, transform_indices = @transform_7, window_bounds = array<i64: 32, 32>}, {pipeline_mode = #tpu.pipeline_mode<synchronous>, transform_indices = @transform_8, window_bounds = array<i64: 1, 32>}, {transform_indices = @transform_9, window_bounds = array<i64: 2, 8, 32>}, {transform_indices = @transform_10, window_bounds = array<i64: 2, 8, 8>}]} {
    %c0_i32 = arith.constant 0 : i32
    %0 = arith.cmpi eq, %arg1, %c0_i32 : i32
    %1 = arith.extui %0 : i1 to i32
    %c0_i32_0 = arith.constant 0 : i32
    %2 = arith.cmpi ne, %1, %c0_i32_0 : i32
    scf.if %2 {
      %c0_24 = arith.constant 0 : index
      %c0_25 = arith.constant 0 : index
      %c0_26 = arith.constant 0 : index
      %33 = vector.load %arg3[%c0_24, %c0_25, %c0_26] : memref<2x8x32xbf16, #tpu.memory_space<vmem>>, vector<2x8x32xbf16>
      %34 = vector.shape_cast %33 : vector<2x8x32xbf16> to vector<16x32xbf16>
      %c0_27 = arith.constant 0 : index
      %c0_28 = arith.constant 0 : index
      %c0_29 = arith.constant 0 : index
      %35 = vector.load %arg4[%c0_27, %c0_28, %c0_29] : memref<2x8x32xbf16, #tpu.memory_space<vmem>>, vector<2x8x32xbf16>
      %36 = vector.shape_cast %35 : vector<2x8x32xbf16> to vector<16x32xbf16>
      %c0_30 = arith.constant 0 : index
      %c0_31 = arith.constant 0 : index
      %37 = vector.load %arg7[%c0_30, %c0_31] : memref<32x32xbf16, #tpu.memory_space<vmem>>, vector<32x32xbf16>
      %cst_32 = arith.constant dense<0.000000e+00> : vector<16x32xf32>
      %38 = tpu.matmul %34, %37, %cst_32 {dimension_numbers = #tpu.dot_dimension_numbers<[1], [0], [0], [1], [0, 0, 1, 1], [], []>} : vector<16x32xbf16>, vector<32x32xbf16>, vector<16x32xf32> -> vector<16x32xf32>
      %c0_33 = arith.constant 0 : index
      %c0_34 = arith.constant 0 : index
      %39 = vector.load %arg8[%c0_33, %c0_34] : memref<1x32xf32, #tpu.memory_space<vmem>>, vector<1x32xf32>
      %40 = vector.broadcast %39 : vector<1x32xf32> to vector<16x32xf32>
      %41 = arith.addf %38, %40 : vector<16x32xf32>
      %c0_35 = arith.constant 0 : index
      %c0_36 = arith.constant 0 : index
      %42 = vector.load %arg9[%c0_35, %c0_36] : memref<32x32xbf16, #tpu.memory_space<vmem>>, vector<32x32xbf16>
      %cst_37 = arith.constant dense<0.000000e+00> : vector<16x32xf32>
      %43 = tpu.matmul %36, %42, %cst_37 {dimension_numbers = #tpu.dot_dimension_numbers<[1], [0], [0], [1], [0, 0, 1, 1], [], []>} : vector<16x32xbf16>, vector<32x32xbf16>, vector<16x32xf32> -> vector<16x32xf32>
      %c0_38 = arith.constant 0 : index
      %c0_39 = arith.constant 0 : index
      %44 = vector.load %arg10[%c0_38, %c0_39] : memref<1x32xf32, #tpu.memory_space<vmem>>, vector<1x32xf32>
      %45 = vector.broadcast %44 : vector<1x32xf32> to vector<16x32xf32>
      %46 = arith.addf %43, %45 : vector<16x32xf32>
      %47 = vector.shape_cast %41 : vector<16x32xf32> to vector<2x8x32xf32>
      %48 = arith.truncf %47 : vector<2x8x32xf32> to vector<2x8x32xbf16>
      %c0_40 = arith.constant 0 : index
      %c0_41 = arith.constant 0 : index
      %c0_42 = arith.constant 0 : index
      %49 = vector.load %arg13[%c0_40, %c0_41, %c0_42] : memref<2x8x32xbf16, #tpu.memory_space<vmem>>, vector<2x8x32xbf16>
      tpu.vector_store %arg13[%c0_40, %c0_41, %c0_42], %48 {strides = array<i32>} : memref<2x8x32xbf16, #tpu.memory_space<vmem>>, vector<2x8x32xbf16>,
      %50 = vector.shape_cast %46 : vector<16x32xf32> to vector<2x8x32xf32>
      %51 = arith.truncf %50 : vector<2x8x32xf32> to vector<2x8x32xbf16>
      %c0_43 = arith.constant 0 : index
      %c0_44 = arith.constant 0 : index
      %c0_45 = arith.constant 0 : index
      %52 = vector.load %arg14[%c0_43, %c0_44, %c0_45] : memref<2x8x32xbf16, #tpu.memory_space<vmem>>, vector<2x8x32xbf16>
      tpu.vector_store %arg14[%c0_43, %c0_44, %c0_45], %51 {strides = array<i32>} : memref<2x8x32xbf16, #tpu.memory_space<vmem>>, vector<2x8x32xbf16>,
    } else {
    }
    %c0 = arith.constant 0 : index
    %c0_1 = arith.constant 0 : index
    %c0_2 = arith.constant 0 : index
    %3 = vector.load %arg2[%c0, %c0_1, %c0_2] : memref<2x8x32xbf16, #tpu.memory_space<vmem>>, vector<2x8x32xbf16>
    %4 = vector.shape_cast %3 : vector<2x8x32xbf16> to vector<16x32xbf16>
    %c0_3 = arith.constant 0 : index
    %c0_4 = arith.constant 0 : index
    %5 = vector.load %arg5[%c0_3, %c0_4] : memref<32x32xbf16, #tpu.memory_space<vmem>>, vector<32x32xbf16>
    %cst = arith.constant dense<0.000000e+00> : vector<16x32xf32>
    %6 = tpu.matmul %4, %5, %cst {dimension_numbers = #tpu.dot_dimension_numbers<[1], [0], [0], [1], [0, 0, 1, 1], [], []>} : vector<16x32xbf16>, vector<32x32xbf16>, vector<16x32xf32> -> vector<16x32xf32>
    %c0_5 = arith.constant 0 : index
    %c0_6 = arith.constant 0 : index
    %7 = vector.load %arg6[%c0_5, %c0_6] : memref<1x32xf32, #tpu.memory_space<vmem>>, vector<1x32xf32>
    %8 = vector.broadcast %7 : vector<1x32xf32> to vector<16x32xf32>
    %9 = arith.addf %6, %8 : vector<16x32xf32>
    %cst_7 = arith.constant 0.176776692 : f32
    %10 = vector.broadcast %cst_7 : f32 to vector<16x32xf32>
    %11 = arith.mulf %9, %10 : vector<16x32xf32>
    %12 = vector.shape_cast %11 : vector<16x32xf32> to vector<2x8x32xf32>
    %13 = arith.truncf %12 : vector<2x8x32xf32> to vector<2x8x32xbf16>
    %c0_8 = arith.constant 0 : index
    %c0_9 = arith.constant 0 : index
    %c0_10 = arith.constant 0 : index
    %14 = vector.load %arg13[%c0_8, %c0_9, %c0_10] : memref<2x8x32xbf16, #tpu.memory_space<vmem>>, vector<2x8x32xbf16>
    %c0_11 = arith.constant 0 : index
    %c0_12 = arith.constant 0 : index
    %c0_13 = arith.constant 0 : index
    %15 = vector.load %arg14[%c0_11, %c0_12, %c0_13] : memref<2x8x32xbf16, #tpu.memory_space<vmem>>, vector<2x8x32xbf16>
    "tpu.trace_start"() <{level = 10 : i32, message = "bqd,bkd->bqk"}> : () -> ()
    %cst_14 = arith.constant dense<0.000000e+00> : vector<2x8x8xf32>
    %16 = tpu.matmul %13, %14, %cst_14 {dimension_numbers = #tpu.dot_dimension_numbers<[2], [2], [1], [1], [0, 0, 0, 1, 1, 1], [0], [0]>} : vector<2x8x32xbf16>, vector<2x8x32xbf16>, vector<2x8x8xf32> -> vector<2x8x8xf32>
    "tpu.trace_stop"() : () -> ()
    %cst_15 = arith.constant dense<0xFF800000> : vector<2x8xf32>
    %17 = vector.multi_reduction <maximumf>, %16, %cst_15 [2] : vector<2x8x8xf32> to vector<2x8xf32>
    %18 = vector.shape_cast %17 : vector<2x8xf32> to vector<2x8x1xf32>
    %19 = vector.broadcast %18 : vector<2x8x1xf32> to vector<2x8x8xf32>
    %20 = arith.subf %16, %19 : vector<2x8x8xf32>
    %21 = math.exp %20 : vector<2x8x8xf32>
    %cst_16 = arith.constant dense<0.000000e+00> : vector<2x8xf32>
    %22 = vector.multi_reduction <add>, %21, %cst_16 [2] : vector<2x8x8xf32> to vector<2x8xf32>
    %23 = vector.shape_cast %22 : vector<2x8xf32> to vector<2x8x1xf32>
    %24 = tpu.reciprocal %23 {approx = true} : vector<2x8x1xf32> -> vector<2x8x1xf32>
    %25 = arith.truncf %21 : vector<2x8x8xf32> to vector<2x8x8xbf16>
    "tpu.trace_start"() <{level = 10 : i32, message = "bqk,bkd->bqd"}> : () -> ()
    %cst_17 = arith.constant dense<0.000000e+00> : vector<2x8x32xf32>
    %26 = tpu.matmul %25, %15, %cst_17 {dimension_numbers = #tpu.dot_dimension_numbers<[2], [1], [1], [2], [0, 0, 0, 1, 1, 2], [0], [0]>} : vector<2x8x8xbf16>, vector<2x8x32xbf16>, vector<2x8x32xf32> -> vector<2x8x32xf32>
    "tpu.trace_stop"() : () -> ()
    %27 = vector.broadcast %24 : vector<2x8x1xf32> to vector<2x8x32xf32>
    %28 = arith.mulf %26, %27 : vector<2x8x32xf32>
    %c0_18 = arith.constant 0 : index
    %c0_19 = arith.constant 0 : index
    %c0_20 = arith.constant 0 : index
    %29 = vector.load %arg11[%c0_18, %c0_19, %c0_20] : memref<2x8x32xf32, #tpu.memory_space<vmem>>, vector<2x8x32xf32>
    tpu.vector_store %arg11[%c0_18, %c0_19, %c0_20], %28 {strides = array<i32>} : memref<2x8x32xf32, #tpu.memory_space<vmem>>, vector<2x8x32xf32>,
    %30 = vector.broadcast %24 : vector<2x8x1xf32> to vector<2x8x8xf32>
    %31 = arith.mulf %21, %30 : vector<2x8x8xf32>
    %c0_21 = arith.constant 0 : index
    %c0_22 = arith.constant 0 : index
    %c0_23 = arith.constant 0 : index
    %32 = vector.load %arg12[%c0_21, %c0_22, %c0_23] : memref<2x8x8xf32, #tpu.memory_space<vmem>>, vector<2x8x8xf32>
    tpu.vector_store %arg12[%c0_21, %c0_22, %c0_23], %31 {strides = array<i32>} : memref<2x8x8xf32, #tpu.memory_space<vmem>>, vector<2x8x8xf32>,
    return
  }
  func.func @transform_0(%arg0: i32, %arg1: i32) -> (i32, i32, i32) {
    %c0_i32 = arith.constant 0 : i32
    %c0_i32_0 = arith.constant 0 : i32
    return %arg0, %arg1, %c0_i32 : i32, i32, i32
  }
  func.func @transform_1(%arg0: i32, %arg1: i32) -> (i32, i32, i32) {
    %c0_i32 = arith.constant 0 : i32
    %c0_i32_0 = arith.constant 0 : i32
    %c0_i32_1 = arith.constant 0 : i32
    return %arg0, %c0_i32, %c0_i32_0 : i32, i32, i32
  }
  func.func @transform_2(%arg0: i32, %arg1: i32) -> (i32, i32, i32) {
    %c0_i32 = arith.constant 0 : i32
    %c0_i32_0 = arith.constant 0 : i32
    %c0_i32_1 = arith.constant 0 : i32
    return %arg0, %c0_i32, %c0_i32_0 : i32, i32, i32
  }
  func.func @transform_3(%arg0: i32, %arg1: i32) -> (i32, i32) {
    %c0_i32 = arith.constant 0 : i32
    %c0_i32_0 = arith.constant 0 : i32
    %c0_i32_1 = arith.constant 0 : i32
    return %c0_i32, %c0_i32_0 : i32, i32
  }
  func.func @transform_4(%arg0: i32, %arg1: i32) -> (i32, i32) {
    %c0_i32 = arith.constant 0 : i32
    %c0_i32_0 = arith.constant 0 : i32
    %c0_i32_1 = arith.constant 0 : i32
    return %c0_i32, %c0_i32_0 : i32, i32
  }
  func.func @transform_5(%arg0: i32, %arg1: i32) -> (i32, i32) {
    %c0_i32 = arith.constant 0 : i32
    %c0_i32_0 = arith.constant 0 : i32
    %c0_i32_1 = arith.constant 0 : i32
    return %c0_i32, %c0_i32_0 : i32, i32
  }
  func.func @transform_6(%arg0: i32, %arg1: i32) -> (i32, i32) {
    %c0_i32 = arith.constant 0 : i32
    %c0_i32_0 = arith.constant 0 : i32
    %c0_i32_1 = arith.constant 0 : i32
    return %c0_i32, %c0_i32_0 : i32, i32
  }
  func.func @transform_7(%arg0: i32, %arg1: i32) -> (i32, i32) {
    %c0_i32 = arith.constant 0 : i32
    %c0_i32_0 = arith.constant 0 : i32
    %c0_i32_1 = arith.constant 0 : i32
    return %c0_i32, %c0_i32_0 : i32, i32
  }
  func.func @transform_8(%arg0: i32, %arg1: i32) -> (i32, i32) {
    %c0_i32 = arith.constant 0 : i32
    %c0_i32_0 = arith.constant 0 : i32
    %c0_i32_1 = arith.constant 0 : i32
    return %c0_i32, %c0_i32_0 : i32, i32
  }
  func.func @transform_9(%arg0: i32, %arg1: i32) -> (i32, i32, i32) {
    %c0_i32 = arith.constant 0 : i32
    %c0_i32_0 = arith.constant 0 : i32
    return %arg0, %arg1, %c0_i32 : i32, i32, i32
  }
  func.func @transform_10(%arg0: i32, %arg1: i32) -> (i32, i32, i32) {
    %c0_i32 = arith.constant 0 : i32
    %c0_i32_0 = arith.constant 0 : i32
    return %arg0, %arg1, %c0_i32 : i32, i32, i32
  }
}

</mosaic_0001>

<llo_original>
// kernel: tpu_custom_call.1
$region0: #{tpu_custom_call.1}
  #allocation0 [shape = 'u32[]', space=smem, size = 0x4, offset = 0x4, fixed_abs, tag = 'smem constant byte address 0x4 - core index']
  #allocation1 [shape = 'u32[144,128]{1,0:T(1,128)}', space=vmem, size = 0x12000, scoped, tag = 'internal scratch']
  #allocation2 [shape = 'bf16[2,8,32]{2,1,0:T(8,128)(2,1)}', space=vmem, size = 0x1000, scoped, tag = 'scratch operand']
  #allocation3 [shape = 'bf16[2,8,32]{2,1,0:T(8,128)(2,1)}', space=vmem, size = 0x1000, scoped, tag = 'scratch operand']
  %s0 = inlined_call_operand.hbm [shape: bf16[2,8,32], index: 0, kind: input, shape index: {}]
  %s1 = inlined_call_operand.hbm [shape: bf16[2,8,32], index: 1, kind: input, shape index: {}]
  %s2 = inlined_call_operand.hbm [shape: bf16[2,8,32], index: 2, kind: input, shape index: {}]
  %s3 = inlined_call_operand.hbm [shape: bf16[32,32], index: 3, kind: input, shape index: {}]
  %s4 = inlined_call_operand.vmem [shape: f32[1,32], index: 4, kind: input, shape index: {}]
  %s5 = inlined_call_operand.vmem [shape: bf16[32,32], index: 5, kind: input, shape index: {}]
  %s6 = inlined_call_operand.vmem [shape: f32[1,32], index: 6, kind: input, shape index: {}]
  %s7 = inlined_call_operand.hbm [shape: bf16[32,32], index: 7, kind: input, shape index: {}]
  %s8 = inlined_call_operand.vmem [shape: f32[1,32], index: 8, kind: input, shape index: {}]
  %s9 = inlined_call_operand.hbm [shape: f32[2,8,32], index: 9, kind: output, shape index: {0}]
  %s10 = inlined_call_operand.hbm [shape: f32[2,8,8], index: 10, kind: output, shape index: {1}]
  %11 = xla_tuple %s9, %s10
  %s12 = sld [smem:[#allocation0]]
  $region78: #{tpu_custom_call.1} parent=0
    _
  %s14 = ssub.s32 1, %s12
  %s15 = scalar_select 0, %s14, %s12
  $region1: #{tpu_custom_call.1} parent=0
    #allocation4 [shape = 'u8[4096]{0}', space=vmem, size = 0x1000, scoped, tag = 'input window, operand 0, single buffered']
    #allocation5 [shape = 's32[1]{0}', space=sflag, size = 0x4, scoped, tag = 'scoped memory for tpu_custom_call.1']
    #allocation6 [shape = 's32[1]{0}', space=sflag, size = 0x4, scoped, tag = 'scoped memory for tpu_custom_call.1']
    #allocation7 [shape = 'u8[4096]{0}', space=vmem, size = 0x1000, scoped, tag = 'input window, operand 1, single buffered']
    #allocation8 [shape = 's32[1]{0}', space=sflag, size = 0x4, scoped, tag = 'scoped memory for tpu_custom_call.1']
    #allocation9 [shape = 'u8[4096]{0}', space=vmem, size = 0x1000, scoped, tag = 'input window, operand 2, single buffered']
    #allocation10 [shape = 'u8[8192]{0}', space=vmem, size = 0x2000, scoped, tag = 'input window, operand 3, single buffered']
    #allocation11 [shape = 's32[1]{0}', space=sflag, size = 0x4, scoped, tag = 'scoped memory for tpu_custom_call.1']
    #allocation12 [shape = 'u8[8192]{0}', space=vmem, size = 0x2000, scoped, tag = 'input window, operand 7, single buffered']
    #allocation13 [shape = 'u8[8192]{0}', space=vmem, size = 0x2000, scoped, tag = 'output window, operand 0, single buffered']
    #allocation14 [shape = 'u8[8192]{0}', space=vmem, size = 0x2000, scoped, tag = 'output window, operand 1, single buffered']
    #allocation15 [shape = 's32[1]{0}', space=sflag, size = 0x4, scoped, tag = 'scoped memory for tpu_custom_call.1']
    %16 = vsyncpa [#allocation5], 0
    %17 = vsyncpa [#allocation8], 0
    %18 = vsyncpa [#allocation11], 0
    %19 = vsyncpa [#allocation6], 0
    %20 = vsyncpa [#allocation15], 0
    // Predicated region
    $region2: #{tpu_custom_call.1} parent=1 // pred_check
      _
    $region3: #{tpu_custom_call.1} parent=1 // pred_check_branch
      %22 = sbr.rel (0) target = $region5
    $region4: #{tpu_custom_call.1} parent=1 // pred_region
      %s24 = ssub.s32 128, 128
      %25 = vsyncadd [#allocation5], %s24
      %s26 = sshll.u32 [#allocation4], 4
      %s27 = int_to_ptr.vmem [resolvable:$true] %s26
      %32 = dma.hbm_to_vmem [thread:$0]  %s0, 128, %s27, [#allocation5], 64, 64, 4
    $region5: #{tpu_custom_call.1} parent=1 // pred_fallthru
      _
    // Predicated region
    $region6: #{tpu_custom_call.1} parent=1 // pred_check
      _
    $region7: #{tpu_custom_call.1} parent=1 // pred_check_branch
      %34 = sbr.rel (0) target = $region9
    $region8: #{tpu_custom_call.1} parent=1 // pred_region
      %s36 = ssub.s32 128, 128
      %37 = vsyncadd [#allocation8], %s36
      %s38 = sshll.u32 [#allocation7], 4
      %s39 = int_to_ptr.vmem [resolvable:$true] %s38
      %44 = dma.hbm_to_vmem [thread:$0]  %s1, 128, %s39, [#allocation8], 64, 64, 4
    $region9: #{tpu_custom_call.1} parent=1 // pred_fallthru
      _
    // Predicated region
    $region10: #{tpu_custom_call.1} parent=1 // pred_check
      _
    $region11: #{tpu_custom_call.1} parent=1 // pred_check_branch
      %46 = sbr.rel (0) target = $region13
    $region12: #{tpu_custom_call.1} parent=1 // pred_region
      %s48 = ssub.s32 128, 128
      %49 = vsyncadd [#allocation8], %s48
      %s50 = sshll.u32 [#allocation9], 4
      %s51 = int_to_ptr.vmem [resolvable:$true] %s50
      %56 = dma.hbm_to_vmem [thread:$0]  %s2, 128, %s51, [#allocation8], 64, 64, 4
    $region13: #{tpu_custom_call.1} parent=1 // pred_fallthru
      _
    // Predicated region
    $region14: #{tpu_custom_call.1} parent=1 // pred_check
      _
    $region15: #{tpu_custom_call.1} parent=1 // pred_check_branch
      %58 = sbr.rel (0) target = $region17
    $region16: #{tpu_custom_call.1} parent=1 // pred_region
      %s60 = ssub.s32 256, 256
      %61 = vsyncadd [#allocation11], %s60
      %s62 = sshll.u32 [#allocation10], 4
      %s63 = int_to_ptr.vmem [resolvable:$true] %s62
      %68 = dma.hbm_to_vmem [thread:$0]  %s3, 256, %s63, [#allocation11], 64, 64, 4
    $region17: #{tpu_custom_call.1} parent=1 // pred_fallthru
      _
    // Predicated region
    $region18: #{tpu_custom_call.1} parent=1 // pred_check
      _
    $region19: #{tpu_custom_call.1} parent=1 // pred_check_branch
      %70 = sbr.rel (0) target = $region21
    $region20: #{tpu_custom_call.1} parent=1 // pred_region
      _
    $region21: #{tpu_custom_call.1} parent=1 // pred_fallthru
      _
    // Predicated region
    $region22: #{tpu_custom_call.1} parent=1 // pred_check
      _
    $region23: #{tpu_custom_call.1} parent=1 // pred_check_branch
      %72 = sbr.rel (0) target = $region25
    $region24: #{tpu_custom_call.1} parent=1 // pred_region
      _
    $region25: #{tpu_custom_call.1} parent=1 // pred_fallthru
      _
    // Predicated region
    $region26: #{tpu_custom_call.1} parent=1 // pred_check
      _
    $region27: #{tpu_custom_call.1} parent=1 // pred_check_branch
      %74 = sbr.rel (0) target = $region29
    $region28: #{tpu_custom_call.1} parent=1 // pred_region
      _
    $region29: #{tpu_custom_call.1} parent=1 // pred_fallthru
      _
    // Predicated region
    $region30: #{tpu_custom_call.1} parent=1 // pred_check
      _
    $region31: #{tpu_custom_call.1} parent=1 // pred_check_branch
      %76 = sbr.rel (0) target = $region33
    $region32: #{tpu_custom_call.1} parent=1 // pred_region
      %s78 = ssub.s32 256, 256
      %79 = vsyncadd [#allocation11], %s78
      %s80 = sshll.u32 [#allocation12], 4
      %s81 = int_to_ptr.vmem [resolvable:$true] %s80
      %86 = dma.hbm_to_vmem [thread:$0]  %s7, 256, %s81, [#allocation11], 64, 64, 4
    $region33: #{tpu_custom_call.1} parent=1 // pred_fallthru
      _
    // Predicated region
    $region34: #{tpu_custom_call.1} parent=1 // pred_check
      _
    $region35: #{tpu_custom_call.1} parent=1 // pred_check_branch
      %88 = sbr.rel (0) target = $region37
    $region36: #{tpu_custom_call.1} parent=1 // pred_region
      _
    $region37: #{tpu_custom_call.1} parent=1 // pred_fallthru
      _
    // Predicated region
    $region38: #{tpu_custom_call.1} parent=1 // pred_check
      _
    $region39: #{tpu_custom_call.1} parent=1 // pred_check_branch
      %90 = sbr.rel (0) target = $region41
    $region40: #{tpu_custom_call.1} parent=1 // pred_region
      %91 = dma.done [#allocation5], 128
    $region41: #{tpu_custom_call.1} parent=1 // pred_fallthru
      _
    // Predicated region
    $region42: #{tpu_custom_call.1} parent=1 // pred_check
      _
    $region43: #{tpu_custom_call.1} parent=1 // pred_check_branch
      %93 = sbr.rel (0) target = $region45
    $region44: #{tpu_custom_call.1} parent=1 // pred_region
      %94 = dma.done [#allocation8], 128
    $region45: #{tpu_custom_call.1} parent=1 // pred_fallthru
      _
    // Predicated region
    $region46: #{tpu_custom_call.1} parent=1 // pred_check
      _
    $region47: #{tpu_custom_call.1} parent=1 // pred_check_branch
      %96 = sbr.rel (0) target = $region49
    $region48: #{tpu_custom_call.1} parent=1 // pred_region
      %97 = dma.done [#allocation8], 128
    $region49: #{tpu_custom_call.1} parent=1 // pred_fallthru
      _
    // Predicated region
    $region50: #{tpu_custom_call.1} parent=1 // pred_check
      _
    $region51: #{tpu_custom_call.1} parent=1 // pred_check_branch
      %99 = sbr.rel (0) target = $region53
    $region52: #{tpu_custom_call.1} parent=1 // pred_region
      %100 = dma.done [#allocation11], 256
    $region53: #{tpu_custom_call.1} parent=1 // pred_fallthru
      _
    // Predicated region
    $region54: #{tpu_custom_call.1} parent=1 // pred_check
      _
    $region55: #{tpu_custom_call.1} parent=1 // pred_check_branch
      %102 = sbr.rel (0) target = $region57
    $region56: #{tpu_custom_call.1} parent=1 // pred_region
      %103 = dma.done [#allocation11], 256
    $region57: #{tpu_custom_call.1} parent=1 // pred_fallthru
      _
    %p105 = scmp.eq.s32.totalorder 0, 0
    // Predicated region
    $region58: #{tpu_custom_call.1} parent=1 // pred_check
      %p106 = pneg %p105
    $region59: #{tpu_custom_call.1} parent=1 // pred_check_branch
      %108 = sbr.rel (%p106) target = $region61
    $region60: #{tpu_custom_call.1} parent=1 // pred_region
      %v109 = vld [vmem:[#allocation7] sm:$0xf]
      %v110 = vld [vmem:[#allocation7 + $0x4] sm:$0xf]
      %v111 = vld [vmem:[#allocation9] sm:$0xf]
      %v112 = vld [vmem:[#allocation9 + $0x4] sm:$0xf]
      %v113 = vld [vmem:[%s5] sm:$0xf]
      %v114 = vld [vmem:[%s5 + $0x4] sm:$0xf]
      %v115 = vld [vmem:[%s5 + $0x8] sm:$0xf]
      %v116 = vld [vmem:[%s5 + $0xc] sm:$0xf]
      %v117 = vld [vmem:[%s6] sm:$0x1]
      %v119 = vlaneseq
      %v120 = vshrl.u32 %v119, 7
      %v121 = vsub.s32 0, %v120
      %v122 = vrot.slane %v117, %v121
      %v126 = vunpack.c.l.b16 %v109
      %v127 = vunpack.c.l.b16 %v110
      %v128 = vpack.c.b16 %v127, %v126
      %v133 = vunpack.c.l.b16 %v113
      %v134 = vunpack.c.l.b16 %v114
      %v135 = vunpack.c.l.b16 %v115
      %v136 = vunpack.c.l.b16 %v116
      %v137 = vpack.c.b16 %v134, %v133
      %v138 = vpack.c.b16 %v136, %v135
      %vm141 = vcmask 261120
      %v143 = vsel %vm141, %v128, 0
      %145 = vmatprep.subr.bf16.mxu0 0
      %146 = vmatpush1.bf16.msra.mxu0 %v137
      %147 = vmatprep.subr.bf16.mxu0 0
      %148 = vmatpush1.bf16.msra.mxu0 %v138
      %149 = vmatprep.subr.bf16.mxu0 0
      %150 = vmatpush1.bf16.msra.mxu0 0
      %151 = vmatprep.subr.bf16.mxu0 0
      %152 = vmatpush1.bf16.msra.mxu0 0
      %153 = vmatprep.subr.bf16.mxu0 0
      %154 = vmatpush1.bf16.msra.mxu0 0
      %155 = vmatprep.subr.bf16.mxu0 0
      %156 = vmatpush1.bf16.msra.mxu0 0
      %157 = vmatprep.subr.bf16.mxu0 0
      %158 = vmatpush1.bf16.msra.mxu0 0
      %159 = vmatprep.subr.bf16.mxu0 0
      %160 = vmatpush1.bf16.msra.mxu0 0
      %161 = vmatprep.subr.bf16.mxu0 0
      %162 = vmatpush1.bf16.msra.mxu0 0
      %163 = vmatprep.subr.bf16.mxu0 0
      %164 = vmatpush1.bf16.msra.mxu0 0
      %165 = vmatprep.subr.bf16.mxu0 0
      %166 = vmatpush1.bf16.msra.mxu0 0
      %167 = vmatprep.subr.bf16.mxu0 0
      %168 = vmatpush1.bf16.msra.mxu0 0
      %169 = vmatprep.subr.bf16.mxu0 0
      %170 = vmatpush1.bf16.msra.mxu0 0
      %171 = vmatprep.subr.bf16.mxu0 0
      %172 = vmatpush1.bf16.msra.mxu0 0
      %173 = vmatprep.subr.bf16.mxu0 0
      %174 = vmatpush1.bf16.msra.mxu0 0
      %175 = vmatprep.subr.bf16.mxu0 0
      %176 = vmatpush1.bf16.msra.mxu0 0
      %177 = vmatprep.mubr.bf16.mxu0 0
      %178 = vmatmul.mubr.bf16.gmra.mrb[0].mxu0 %v143
      %v179 = vpop.f32.mrb[0].mxu0
      %v180 = vadd.f32 %v122, %v179
      %v181 = vpop.f32.mrb[0].mxu0
      %v182 = vpop.f32.mrb[0].mxu0
      %v183 = vadd.f32 %v122, %v182
      %v184 = vpop.f32.mrb[0].mxu0
      %185 = vdwg.mxu0
      %v186 = vld [vmem:[#allocation12] sm:$0xf]
      %v187 = vld [vmem:[#allocation12 + $0x4] sm:$0xf]
      %v188 = vld [vmem:[#allocation12 + $0x8] sm:$0xf]
      %v189 = vld [vmem:[#allocation12 + $0xc] sm:$0xf]
      %v190 = vld [vmem:[%s8] sm:$0x1]
      %v192 = vlaneseq
      %v193 = vshrl.u32 %v192, 7
      %v194 = vsub.s32 0, %v193
      %v195 = vrot.slane %v190, %v194
      %v199 = vunpack.c.l.b16 %v111
      %v200 = vunpack.c.l.b16 %v112
      %v201 = vpack.c.b16 %v200, %v199
      %v206 = vunpack.c.l.b16 %v186
      %v207 = vunpack.c.l.b16 %v187
      %v208 = vunpack.c.l.b16 %v188
      %v209 = vunpack.c.l.b16 %v189
      %v210 = vpack.c.b16 %v207, %v206
      %v211 = vpack.c.b16 %v209, %v208
      %v215 = vsel %vm141, %v201, 0
      %217 = vmatprep.subr.bf16.mxu0 0
      %218 = vmatpush1.bf16.msra.mxu0 %v210
      %219 = vmatprep.subr.bf16.mxu0 0
      %220 = vmatpush1.bf16.msra.mxu0 %v211
      %221 = vmatprep.subr.bf16.mxu0 0
      %222 = vmatpush1.bf16.msra.mxu0 0
      %223 = vmatprep.subr.bf16.mxu0 0
      %224 = vmatpush1.bf16.msra.mxu0 0
      %225 = vmatprep.subr.bf16.mxu0 0
      %226 = vmatpush1.bf16.msra.mxu0 0
      %227 = vmatprep.subr.bf16.mxu0 0
      %228 = vmatpush1.bf16.msra.mxu0 0
      %229 = vmatprep.subr.bf16.mxu0 0
      %230 = vmatpush1.bf16.msra.mxu0 0
      %231 = vmatprep.subr.bf16.mxu0 0
      %232 = vmatpush1.bf16.msra.mxu0 0
      %233 = vmatprep.subr.bf16.mxu0 0
      %234 = vmatpush1.bf16.msra.mxu0 0
      %235 = vmatprep.subr.bf16.mxu0 0
      %236 = vmatpush1.bf16.msra.mxu0 0
      %237 = vmatprep.subr.bf16.mxu0 0
      %238 = vmatpush1.bf16.msra.mxu0 0
      %239 = vmatprep.subr.bf16.mxu0 0
      %240 = vmatpush1.bf16.msra.mxu0 0
      %241 = vmatprep.subr.bf16.mxu0 0
      %242 = vmatpush1.bf16.msra.mxu0 0
      %243 = vmatprep.subr.bf16.mxu0 0
      %244 = vmatpush1.bf16.msra.mxu0 0
      %245 = vmatprep.subr.bf16.mxu0 0
      %246 = vmatpush1.bf16.msra.mxu0 0
      %247 = vmatprep.subr.bf16.mxu0 0
      %248 = vmatpush1.bf16.msra.mxu0 0
      %249 = vmatprep.mubr.bf16.mxu0 0
      %250 = vmatmul.mubr.bf16.gmra.mrb[0].mxu0 %v215
      %v251 = vpop.f32.mrb[0].mxu0
      %v252 = vadd.f32 %v195, %v251
      %v253 = vpop.f32.mrb[0].mxu0
      %v254 = vpop.f32.mrb[0].mxu0
      %v255 = vadd.f32 %v195, %v254
      %v256 = vpop.f32.mrb[0].mxu0
      %257 = vdwg.mxu0
      %v258 = vpack.c.bf16 %v180, %v180
      %v259 = vpack.c.bf16 %v183, %v183
      %vm260 = vcmask 257024
      %261 = vst.msk [vmem:[#allocation2] sm:$0xf] %vm260, %v258
      %262 = vst.msk [vmem:[#allocation2 + $0x4] sm:$0xf] %vm260, %v259
      %v263 = vpack.c.bf16 %v252, %v252
      %v264 = vpack.c.bf16 %v255, %v255
      %265 = vst.msk [vmem:[#allocation3] sm:$0xf] %vm260, %v263
      %266 = vst.msk [vmem:[#allocation3 + $0x4] sm:$0xf] %vm260, %v264
    $region61: #{tpu_custom_call.1} parent=1 // pred_fallthru
      _
    %v267 = vld [vmem:[#allocation4] sm:$0xf]
    %v268 = vld [vmem:[#allocation4 + $0x4] sm:$0xf]
    %v269 = vld [vmem:[#allocation10] sm:$0xf]
    %v270 = vld [vmem:[#allocation10 + $0x4] sm:$0xf]
    %v271 = vld [vmem:[#allocation10 + $0x8] sm:$0xf]
    %v272 = vld [vmem:[#allocation10 + $0xc] sm:$0xf]
    %v273 = vld [vmem:[%s4] sm:$0x1]
    %v275 = vlaneseq
    %v276 = vshrl.u32 %v275, 7
    %v277 = vsub.s32 0, %v276
    %v278 = vrot.slane %v273, %v277
    %v282 = vunpack.c.l.b16 %v267
    %v283 = vunpack.c.l.b16 %v268
    %v284 = vpack.c.b16 %v283, %v282
    %v289 = vunpack.c.l.b16 %v269
    %v290 = vunpack.c.l.b16 %v270
    %v291 = vunpack.c.l.b16 %v271
    %v292 = vunpack.c.l.b16 %v272
    %v293 = vpack.c.b16 %v290, %v289
    %v294 = vpack.c.b16 %v292, %v291
    %vm297 = vcmask 261120
    %v299 = vsel %vm297, %v284, 0
    %301 = vmatprep.subr.bf16.mxu0 0
    %302 = vmatpush1.bf16.msra.mxu0 %v293
    %303 = vmatprep.subr.bf16.mxu0 0
    %304 = vmatpush1.bf16.msra.mxu0 %v294
    %305 = vmatprep.subr.bf16.mxu0 0
    %306 = vmatpush1.bf16.msra.mxu0 0
    %307 = vmatprep.subr.bf16.mxu0 0
    %308 = vmatpush1.bf16.msra.mxu0 0
    %309 = vmatprep.subr.bf16.mxu0 0
    %310 = vmatpush1.bf16.msra.mxu0 0
    %311 = vmatprep.subr.bf16.mxu0 0
    %312 = vmatpush1.bf16.msra.mxu0 0
    %313 = vmatprep.subr.bf16.mxu0 0
    %314 = vmatpush1.bf16.msra.mxu0 0
    %315 = vmatprep.subr.bf16.mxu0 0
    %316 = vmatpush1.bf16.msra.mxu0 0
    %317 = vmatprep.subr.bf16.mxu0 0
    %318 = vmatpush1.bf16.msra.mxu0 0
    %319 = vmatprep.subr.bf16.mxu0 0
    %320 = vmatpush1.bf16.msra.mxu0 0
    %321 = vmatprep.subr.bf16.mxu0 0
    %322 = vmatpush1.bf16.msra.mxu0 0
    %323 = vmatprep.subr.bf16.mxu0 0
    %324 = vmatpush1.bf16.msra.mxu0 0
    %325 = vmatprep.subr.bf16.mxu0 0
    %326 = vmatpush1.bf16.msra.mxu0 0
    %327 = vmatprep.subr.bf16.mxu0 0
    %328 = vmatpush1.bf16.msra.mxu0 0
    %329 = vmatprep.subr.bf16.mxu0 0
    %330 = vmatpush1.bf16.msra.mxu0 0
    %331 = vmatprep.subr.bf16.mxu0 0
    %332 = vmatpush1.bf16.msra.mxu0 0
    %333 = vmatprep.mubr.bf16.mxu0 0
    %334 = vmatmul.mubr.bf16.gmra.mrb[0].mxu0 %v299
    %v335 = vpop.f32.mrb[0].mxu0
    %v336 = vadd.f32 %v278, %v335
    %v337 = vpop.f32.mrb[0].mxu0
    %v338 = vpop.f32.mrb[0].mxu0
    %v339 = vadd.f32 %v278, %v338
    %v340 = vpop.f32.mrb[0].mxu0
    %341 = vdwg.mxu0
    %v342 = vmul.f32 %v336, 0.17677669
    %v343 = vmul.f32 %v339, 0.17677669
    %v344 = vpack.c.bf16 %v342, %v342
    %v345 = vpack.c.bf16 %v343, %v343
    %v346 = vld [vmem:[#allocation2] sm:$0xf]
    %v347 = vld [vmem:[#allocation2 + $0x4] sm:$0xf]
    %v348 = vld [vmem:[#allocation3] sm:$0xf]
    %v349 = vld [vmem:[#allocation3 + $0x4] sm:$0xf]
    %v351 = vsel %vm297, %v344, 0
    %v354 = vsel %vm297, %v346, 0
    %356 = vmatprep.subr.bf16.mxu0 0
    %357 = vmatpush1.bf16.xpose.msra.mxu0 %v354
    %358 = vmatprep.subr.bf16.mxu0 0
    %359 = vmatpush1.bf16.xpose.msra.mxu0 0
    %360 = vmatprep.subr.bf16.mxu0 0
    %361 = vmatpush1.bf16.xpose.msra.mxu0 0
    %362 = vmatprep.subr.bf16.mxu0 0
    %363 = vmatpush1.bf16.xpose.msra.mxu0 0
    %364 = vmatprep.subr.bf16.mxu0 0
    %365 = vmatpush1.bf16.xpose.msra.mxu0 0
    %366 = vmatprep.subr.bf16.mxu0 0
    %367 = vmatpush1.bf16.xpose.msra.mxu0 0
    %368 = vmatprep.subr.bf16.mxu0 0
    %369 = vmatpush1.bf16.xpose.msra.mxu0 0
    %370 = vmatprep.subr.bf16.mxu0 0
    %371 = vmatpush1.bf16.xpose.msra.mxu0 0
    %372 = vmatprep.subr.bf16.mxu0 0
    %373 = vmatpush1.bf16.xpose.msra.mxu0 0
    %374 = vmatprep.subr.bf16.mxu0 0
    %375 = vmatpush1.bf16.xpose.msra.mxu0 0
    %376 = vmatprep.subr.bf16.mxu0 0
    %377 = vmatpush1.bf16.xpose.msra.mxu0 0
    %378 = vmatprep.subr.bf16.mxu0 0
    %379 = vmatpush1.bf16.xpose.msra.mxu0 0
    %380 = vmatprep.subr.bf16.mxu0 0
    %381 = vmatpush1.bf16.xpose.msra.mxu0 0
    %382 = vmatprep.subr.bf16.mxu0 0
    %383 = vmatpush1.bf16.xpose.msra.mxu0 0
    %384 = vmatprep.subr.bf16.mxu0 0
    %385 = vmatpush1.bf16.xpose.msra.mxu0 0
    %386 = vmatprep.subr.bf16.mxu0 0
    %387 = vmatpush1.bf16.xpose.msra.mxu0 0
    %388 = vmatprep.mubr.bf16.mxu0 0
    %389 = vmatmul.mubr.bf16.gmra.mrb[0].mxu0 %v351
    %v390 = vpop.f32.mrb[0].mxu0
    %v391 = vadd.f32 0.0, %v390
    %v392 = vpop.f32.mrb[0].mxu0
    %v393 = vpop.f32.mrb[0].mxu0
    %v394 = vpop.f32.mrb[0].mxu0
    %395 = vdwg.mxu0
    %v397 = vsel %vm297, %v345, 0
    %v400 = vsel %vm297, %v347, 0
    %402 = vmatprep.subr.bf16.mxu0 0
    %403 = vmatpush1.bf16.xpose.msra.mxu0 %v400
    %404 = vmatprep.subr.bf16.mxu0 0
    %405 = vmatpush1.bf16.xpose.msra.mxu0 0
    %406 = vmatprep.subr.bf16.mxu0 0
    %407 = vmatpush1.bf16.xpose.msra.mxu0 0
    %408 = vmatprep.subr.bf16.mxu0 0
    %409 = vmatpush1.bf16.xpose.msra.mxu0 0
    %410 = vmatprep.subr.bf16.mxu0 0
    %411 = vmatpush1.bf16.xpose.msra.mxu0 0
    %412 = vmatprep.subr.bf16.mxu0 0
    %413 = vmatpush1.bf16.xpose.msra.mxu0 0
    %414 = vmatprep.subr.bf16.mxu0 0
    %415 = vmatpush1.bf16.xpose.msra.mxu0 0
    %416 = vmatprep.subr.bf16.mxu0 0
    %417 = vmatpush1.bf16.xpose.msra.mxu0 0
    %418 = vmatprep.subr.bf16.mxu0 0
    %419 = vmatpush1.bf16.xpose.msra.mxu0 0
    %420 = vmatprep.subr.bf16.mxu0 0
    %421 = vmatpush1.bf16.xpose.msra.mxu0 0
    %422 = vmatprep.subr.bf16.mxu0 0
    %423 = vmatpush1.bf16.xpose.msra.mxu0 0
    %424 = vmatprep.subr.bf16.mxu0 0
    %425 = vmatpush1.bf16.xpose.msra.mxu0 0
    %426 = vmatprep.subr.bf16.mxu0 0
    %427 = vmatpush1.bf16.xpose.msra.mxu0 0
    %428 = vmatprep.subr.bf16.mxu0 0
    %429 = vmatpush1.bf16.xpose.msra.mxu0 0
    %430 = vmatprep.subr.bf16.mxu0 0
    %431 = vmatpush1.bf16.xpose.msra.mxu0 0
    %432 = vmatprep.subr.bf16.mxu0 0
    %433 = vmatpush1.bf16.xpose.msra.mxu0 0
    %434 = vmatprep.mubr.bf16.mxu0 0
    %435 = vmatmul.mubr.bf16.gmra.mrb[0].mxu0 %v397
    %v436 = vpop.f32.mrb[0].mxu0
    %v437 = vadd.f32 0.0, %v436
    %v438 = vpop.f32.mrb[0].mxu0
    %v439 = vpop.f32.mrb[0].mxu0
    %v440 = vpop.f32.mrb[0].mxu0
    %441 = vdwg.mxu0
    %vm442 = vcmask 64512
    %v443 = vsel %vm442, %v391, -inf
    %444 = vmax.xlane.f32.xlu0 %v443
    %v445 = vpop.xlane.xlu0 %444
    %v446 = vsel %vm442, %v437, -inf
    %447 = vmax.xlane.f32.xlu0 %v446
    %v448 = vpop.xlane.xlu0 %447
    %v449 = vsub.f32 %v391, %v445
    %v450 = vsub.f32 %v437, %v448
    %v451 = vmul.f32 %v449, 1.442695
    %v452 = vpow.pop %v451
    %v453 = vmul.f32 %v450, 1.442695
    %v454 = vpow.pop %v453
    %v455 = vsel %vm442, %v452, 0.0
    %456 = vadd.xlane.f32.xlu0 %v455
    %v457 = vpop.xlane.xlu0 %456
    %v458 = vsel %vm442, %v454, 0.0
    %459 = vadd.xlane.f32.xlu0 %v458
    %v460 = vpop.xlane.xlu0 %459
    %v461 = vrcp.pop %v457
    %v462 = vrcp.pop %v460
    %v463 = vpack.c.bf16 %v452, %v452
    %v464 = vpack.c.bf16 %v454, %v454
    %v466 = vsel %vm442, %v463, 0
    %vm468 = vcmask 1043456
    %v470 = vsel %vm468, %v348, 0
    %472 = vmatprep.subr.bf16.mxu0 0
    %473 = vmatpush1.bf16.msra.mxu0 %v470
    %474 = vmatprep.subr.bf16.mxu0 0
    %475 = vmatpush1.bf16.msra.mxu0 0
    %476 = vmatprep.subr.bf16.mxu0 0
    %477 = vmatpush1.bf16.msra.mxu0 0
    %478 = vmatprep.subr.bf16.mxu0 0
    %479 = vmatpush1.bf16.msra.mxu0 0
    %480 = vmatprep.subr.bf16.mxu0 0
    %481 = vmatpush1.bf16.msra.mxu0 0
    %482 = vmatprep.subr.bf16.mxu0 0
    %483 = vmatpush1.bf16.msra.mxu0 0
    %484 = vmatprep.subr.bf16.mxu0 0
    %485 = vmatpush1.bf16.msra.mxu0 0
    %486 = vmatprep.subr.bf16.mxu0 0
    %487 = vmatpush1.bf16.msra.mxu0 0
    %488 = vmatprep.subr.bf16.mxu0 0
    %489 = vmatpush1.bf16.msra.mxu0 0
    %490 = vmatprep.subr.bf16.mxu0 0
    %491 = vmatpush1.bf16.msra.mxu0 0
    %492 = vmatprep.subr.bf16.mxu0 0
    %493 = vmatpush1.bf16.msra.mxu0 0
    %494 = vmatprep.subr.bf16.mxu0 0
    %495 = vmatpush1.bf16.msra.mxu0 0
    %496 = vmatprep.subr.bf16.mxu0 0
    %497 = vmatpush1.bf16.msra.mxu0 0
    %498 = vmatprep.subr.bf16.mxu0 0
    %499 = vmatpush1.bf16.msra.mxu0 0
    %500 = vmatprep.subr.bf16.mxu0 0
    %501 = vmatpush1.bf16.msra.mxu0 0
    %502 = vmatprep.subr.bf16.mxu0 0
    %503 = vmatpush1.bf16.msra.mxu0 0
    %504 = vmatprep.mubr.bf16.mxu0 0
    %505 = vmatmul.mubr.bf16.gmra.mrb[0].mxu0 %v466
    %v506 = vpop.f32.mrb[0].mxu0
    %v507 = vadd.f32 0.0, %v506
    %v508 = vpop.f32.mrb[0].mxu0
    %v509 = vpop.f32.mrb[0].mxu0
    %v510 = vpop.f32.mrb[0].mxu0
    %511 = vdwg.mxu0
    %v513 = vsel %vm442, %v464, 0
    %v516 = vsel %vm468, %v349, 0
    %518 = vmatprep.subr.bf16.mxu0 0
    %519 = vmatpush1.bf16.msra.mxu0 %v516
    %520 = vmatprep.subr.bf16.mxu0 0
    %521 = vmatpush1.bf16.msra.mxu0 0
    %522 = vmatprep.subr.bf16.mxu0 0
    %523 = vmatpush1.bf16.msra.mxu0 0
    %524 = vmatprep.subr.bf16.mxu0 0
    %525 = vmatpush1.bf16.msra.mxu0 0
    %526 = vmatprep.subr.bf16.mxu0 0
    %527 = vmatpush1.bf16.msra.mxu0 0
    %528 = vmatprep.subr.bf16.mxu0 0
    %529 = vmatpush1.bf16.msra.mxu0 0
    %530 = vmatprep.subr.bf16.mxu0 0
    %531 = vmatpush1.bf16.msra.mxu0 0
    %532 = vmatprep.subr.bf16.mxu0 0
    %533 = vmatpush1.bf16.msra.mxu0 0
    %534 = vmatprep.subr.bf16.mxu0 0
    %535 = vmatpush1.bf16.msra.mxu0 0
    %536 = vmatprep.subr.bf16.mxu0 0
    %537 = vmatpush1.bf16.msra.mxu0 0
    %538 = vmatprep.subr.bf16.mxu0 0
    %539 = vmatpush1.bf16.msra.mxu0 0
    %540 = vmatprep.subr.bf16.mxu0 0
    %541 = vmatpush1.bf16.msra.mxu0 0
    %542 = vmatprep.subr.bf16.mxu0 0
    %543 = vmatpush1.bf16.msra.mxu0 0
    %544 = vmatprep.subr.bf16.mxu0 0
    %545 = vmatpush1.bf16.msra.mxu0 0
    %546 = vmatprep.subr.bf16.mxu0 0
    %547 = vmatpush1.bf16.msra.mxu0 0
    %548 = vmatprep.subr.bf16.mxu0 0
    %549 = vmatpush1.bf16.msra.mxu0 0
    %550 = vmatprep.mubr.bf16.mxu0 0
    %551 = vmatmul.mubr.bf16.gmra.mrb[0].mxu0 %v513
    %v552 = vpop.f32.mrb[0].mxu0
    %v553 = vadd.f32 0.0, %v552
    %v554 = vpop.f32.mrb[0].mxu0
    %v555 = vpop.f32.mrb[0].mxu0
    %v556 = vpop.f32.mrb[0].mxu0
    %557 = vdwg.mxu0
    %v558 = vmul.f32 %v507, %v461
    %v559 = vmul.f32 %v553, %v462
    %560 = vst.msk [vmem:[#allocation13] sm:$0xff] %vm297, %v558
    %561 = vst.msk [vmem:[#allocation13 + $0x8] sm:$0xff] %vm297, %v559
    %v562 = vmul.f32 %v452, %v461
    %v563 = vmul.f32 %v454, %v462
    %564 = vst.msk [vmem:[#allocation14] sm:$0xff] %vm442, %v562
    %565 = vst.msk [vmem:[#allocation14 + $0x8] sm:$0xff] %vm442, %v563
    // Predicated region
    $region62: #{tpu_custom_call.1} parent=1 // pred_check
      _
    $region63: #{tpu_custom_call.1} parent=1 // pred_check_branch
      %567 = sbr.rel (0) target = $region65
    $region64: #{tpu_custom_call.1} parent=1 // pred_region
      %s569 = ssub.s32 256, 256
      %570 = vsyncadd [#allocation6], %s569
      %s571 = sshll.u32 [#allocation13], 4
      %s572 = int_to_ptr.vmem [resolvable:$true] %s571
      %577 = dma.vmem_to_hbm [thread:$0]  %s572, 256, %s9, [#allocation6], 128, 128, 8
    $region65: #{tpu_custom_call.1} parent=1 // pred_fallthru
      _
    // Predicated region
    $region66: #{tpu_custom_call.1} parent=1 // pred_check
      _
    $region67: #{tpu_custom_call.1} parent=1 // pred_check_branch
      %579 = sbr.rel (0) target = $region69
    $region68: #{tpu_custom_call.1} parent=1 // pred_region
      %s581 = ssub.s32 256, 256
      %582 = vsyncadd [#allocation15], %s581
      %s583 = sshll.u32 [#allocation14], 4
      %s584 = int_to_ptr.vmem [resolvable:$true] %s583
      %589 = dma.vmem_to_hbm [thread:$0]  %s584, 256, %s10, [#allocation15], 128, 128, 8
    $region69: #{tpu_custom_call.1} parent=1 // pred_fallthru
      _
    // Predicated region
    $region70: #{tpu_custom_call.1} parent=1 // pred_check
      _
    $region71: #{tpu_custom_call.1} parent=1 // pred_check_branch
      %591 = sbr.rel (0) target = $region73
    $region72: #{tpu_custom_call.1} parent=1 // pred_region
      %592 = dma.done [#allocation6], 256
    $region73: #{tpu_custom_call.1} parent=1 // pred_fallthru
      _
    // Predicated region
    $region74: #{tpu_custom_call.1} parent=1 // pred_check
      _
    $region75: #{tpu_custom_call.1} parent=1 // pred_check_branch
      %594 = sbr.rel (0) target = $region77
    $region76: #{tpu_custom_call.1} parent=1 // pred_region
      %595 = dma.done [#allocation15], 256
    $region77: #{tpu_custom_call.1} parent=1 // pred_fallthru
      _
    %596 = vsyncpa [#allocation5], 1
    %597 = vsyncpa [#allocation8], 1
    %598 = vsyncpa [#allocation11], 1
    %599 = vsyncpa [#allocation6], 1
    %600 = vsyncpa [#allocation15], 1

</llo_original>
